<compile_context>
chip_gen: v6e
topology: v6e:2x2x1
jax: 0.10.0
libtpu: 0.0.40
codegen_flags: <defaults>
</compile_context>

<pallas_src>
import functools

import jax
import jax.numpy as jnp
from jax import lax
from jax.experimental import pallas as pl
from jax.experimental.pallas import tpu as pltpu

BN_EPS = 1e-5
LANE = 128


# ---------------------------------------------------------------------------
# Fused kernel: all residual blocks + final linear in one pallas_call
# ---------------------------------------------------------------------------
def _make_fused_generator_kernel(embedding_dim, generator_dims, compute_dtype):
    n_layers = len(generator_dims)
    total_dim = embedding_dim + sum(generator_dims)

    def kernel(*refs):
        # refs = [x, (w_i, gamma_i, beta_i) * n_layers, final_w, final_b,
        #         out, buf_scratch]
        x_ref = refs[0]
        res_refs = refs[1:1 + 3 * n_layers]
        wf_ref = refs[1 + 3 * n_layers]
        bf_ref = refs[2 + 3 * n_layers]
        out_ref = refs[3 + 3 * n_layers]
        buf_ref = refs[4 + 3 * n_layers]

        # Place the original input in the trailing columns so that after every
        # block the live activation buf[:, offset:] equals torch.cat([out, x], 1).
        offset = total_dim - embedding_dim
        buf_ref[:, offset:] = x_ref[...]

        for i in range(n_layers):
            w_ref = res_refs[3 * i]
            gamma_ref = res_refs[3 * i + 1]
            beta_ref = res_refs[3 * i + 2]
            g = generator_dims[i]

            act = buf_ref[:, offset:]                       # (B, cur_dim), f32
            # Linear (bias omitted: absorbed by the BN mean subtraction below).
            h = jnp.dot(act.astype(compute_dtype), w_ref[...],
                        preferred_element_type=jnp.float32)

            # BatchNorm1d, training-mode stats (biased variance), all in f32.
            mean = jnp.mean(h, axis=0, keepdims=True)
            diff = h - mean
            var = jnp.mean(diff * diff, axis=0, keepdims=True)
            scale = gamma_ref[...] * lax.rsqrt(var + BN_EPS)   # (1, g), EUP rsqrt
            bn_out = diff * scale + beta_ref[...]

            # ReLU, then "concat" = write into the columns in front of `offset`.
            offset -= g
            buf_ref[:, offset:offset + g] = jnp.maximum(bn_out, 0.0)

        assert offset == 0  # static sanity check at trace time

        # Final Linear over the full resident activation; lane-dense (padded) out.
        act = buf_ref[...]
        out_ref[...] = (
            jnp.dot(act.astype(compute_dtype), wf_ref[...],
                    preferred_element_type=jnp.float32)
            + bf_ref[...]
        )

    return kernel


def _full_spec(shape):
    # Full-array block (block_shape == array shape), single grid point.
    return pl.BlockSpec(shape, lambda: tuple(0 for _ in shape))


# ---------------------------------------------------------------------------
# Wrapper: one pallas_call for the whole forward pass
# ---------------------------------------------------------------------------
def generator_forward(params, x, compute_dtype=jnp.bfloat16):
    B, embedding_dim = x.shape
    generator_dims = tuple(p["w"].shape[1] for p in params["residuals"])
    total_dim = embedding_dim + sum(generator_dims)
    data_dim = params["final_w"].shape[1]
    data_dim_pad = ((data_dim + LANE - 1) // LANE) * LANE

    inputs = [x]
    in_specs = [_full_spec(x.shape)]
    for p in params["residuals"]:
        w = p["w"].astype(compute_dtype)        # pre-cast: halves the weight DMA for bf16
        inputs += [w, p["gamma"], p["beta"]]
        in_specs += [_full_spec(w.shape),
                     _full_spec(p["gamma"].shape),
                     _full_spec(p["beta"].shape)]

    pad = data_dim_pad - data_dim
    wf = jnp.pad(params["final_w"], ((0, 0), (0, pad))).astype(compute_dtype)
    bf = jnp.pad(params["final_b"], ((0, 0), (0, pad)))
    inputs += [wf, bf]
    in_specs += [_full_spec(wf.shape), _full_spec(bf.shape)]

    kernel = _make_fused_generator_kernel(embedding_dim, generator_dims,
                                          compute_dtype)

    out_padded = pl.pallas_call(
        kernel,
        out_shape=jax.ShapeDtypeStruct((B, data_dim_pad), jnp.float32),
        grid=(),
        in_specs=in_specs,
        out_specs=_full_spec((B, data_dim_pad)),
        scratch_shapes=[pltpu.VMEM((B, total_dim), jnp.float32)],
    )(*inputs)

    return out_padded[:, :data_dim]


# ---------------------------------------------------------------------------
# Parameter construction (deterministic, PyTorch-like uniform init)
# ---------------------------------------------------------------------------
def init_generator_params(key, embedding_dim, generator_dim, data_dim):
    params = {"residuals": []}
    dim = embedding_dim
    for item in generator_dim:
        key, kw, kb = jax.random.split(key, 3)
        bound = 1.0 / jnp.sqrt(dim)
        w = jax.random.uniform(kw, (dim, item), jnp.float32, -bound, bound)
        b = jax.random.uniform(kb, (1, item), jnp.float32, -bound, bound)
        gamma = jnp.ones((1, item), jnp.float32)
        beta = jnp.zeros((1, item), jnp.float32)
        # `b` is kept for module parity but is mathematically absorbed by BN.
        params["residuals"].append({"w": w, "b": b, "gamma": gamma, "beta": beta})
        dim += item
    key, kw, kb = jax.random.split(key, 3)
    bound = 1.0 / jnp.sqrt(dim)
    params["final_w"] = jax.random.uniform(kw, (dim, data_dim), jnp.float32,
                                           -bound, bound)
    params["final_b"] = jax.random.uniform(kb, (1, data_dim), jnp.float32,
                                           -bound, bound)
    return params


# ---------------------------------------------------------------------------
# Pure-JAX reference (PyTorch-faithful: includes the fc bias before BN)
# ---------------------------------------------------------------------------
def generator_reference(params, x, compute_dtype=jnp.float32):
    h = x
    for p in params["residuals"]:
        lin = jnp.dot(h.astype(compute_dtype), p["w"].astype(compute_dtype),
                      preferred_element_type=jnp.float32) + p["b"]
        mean = jnp.mean(lin, axis=0, keepdims=True)
        diff = lin - mean
        var = jnp.mean(diff * diff, axis=0, keepdims=True)
        bn = diff * (p["gamma"] * lax.rsqrt(var + BN_EPS)) + p["beta"]
        out = jnp.maximum(bn, 0.0)
        h = jnp.concatenate([out, h], axis=1)
    return (jnp.dot(h.astype(compute_dtype),
                    params["final_w"].astype(compute_dtype),
                    preferred_element_type=jnp.float32)
            + params["final_b"])


if __name__ == "__main__":
    # Small shapes consistent with the module: z of shape (batch, embedding_dim).
    batch = 8
    embedding_dim = 32
    generator_dim = (32, 32)
    data_dim = 16

    key = jax.random.PRNGKey(0)
    key, kx = jax.random.split(key)
    x = jax.random.normal(kx, (batch, embedding_dim), jnp.float32)
    params = init_generator_params(key, embedding_dim, generator_dim, data_dim)

    fwd = jax.jit(generator_forward, static_argnames=("compute_dtype",))

    # --- f32 path: strict check against the PyTorch-faithful reference -------
    out_f32 = jax.block_until_ready(fwd(params, x, compute_dtype=jnp.float32))
    ref_f32 = generator_reference(params, x, compute_dtype=jnp.float32)
    assert out_f32.shape == (batch, data_dim)
    assert jnp.allclose(out_f32, ref_f32, atol=1e-4, rtol=1e-4), \
        "f32 mismatch vs reference"

    # --- bf16 MXU path: check against a bf16 reference doing identical math --
    out_bf16 = jax.block_until_ready(fwd(params, x, compute_dtype=jnp.bfloat16))
    ref_bf16 = generator_reference(params, x, compute_dtype=jnp.bfloat16)
    assert out_bf16.shape == (batch, data_dim)
    assert jnp.allclose(out_bf16, ref_bf16, atol=5e-3, rtol=5e-3), \
        "bf16 mismatch vs bf16 reference"

    print("KERNEL_OK")
</pallas_src>

<mosaic_0001>
module attributes {stable_mosaic.version = 11 : i64} {
  func.func @kernel(%arg0: memref<8x32xf32, #tpu.memory_space<vmem>>, %arg1: memref<32x32xf32, #tpu.memory_space<vmem>>, %arg2: memref<1x32xf32, #tpu.memory_space<vmem>>, %arg3: memref<1x32xf32, #tpu.memory_space<vmem>>, %arg4: memref<64x32xf32, #tpu.memory_space<vmem>>, %arg5: memref<1x32xf32, #tpu.memory_space<vmem>>, %arg6: memref<1x32xf32, #tpu.memory_space<vmem>>, %arg7: memref<96x128xf32, #tpu.memory_space<vmem>>, %arg8: memref<1x128xf32, #tpu.memory_space<vmem>>, %arg9: memref<8x128xf32, #tpu.memory_space<vmem>>, %arg10: memref<8x96xf32, #tpu.memory_space<vmem>>) attributes {dimension_semantics = [], scalar_prefetch = 0 : i64, scratch_operands = 1 : i64, tpu.core_type = #tpu.core_type<tc>} {
    %c0 = arith.constant 0 : index
    %c0_0 = arith.constant 0 : index
    %0 = vector.load %arg0[%c0, %c0_0] : memref<8x32xf32, #tpu.memory_space<vmem>>, vector<8x32xf32>
    %c0_1 = arith.constant 0 : index
    %c64 = arith.constant 64 : index
    %1 = vector.load %arg10[%c0_1, %c64] : memref<8x96xf32, #tpu.memory_space<vmem>>, vector<8x32xf32>
    tpu.vector_store %arg10[%c0_1, %c64], %0 {strides = array<i32>} : memref<8x96xf32, #tpu.memory_space<vmem>>, vector<8x32xf32>,
    %c0_2 = arith.constant 0 : index
    %c64_3 = arith.constant 64 : index
    %2 = vector.load %arg10[%c0_2, %c64_3] : memref<8x96xf32, #tpu.memory_space<vmem>>, vector<8x32xf32>
    %c0_4 = arith.constant 0 : index
    %c0_5 = arith.constant 0 : index
    %3 = vector.load %arg1[%c0_4, %c0_5] : memref<32x32xf32, #tpu.memory_space<vmem>>, vector<32x32xf32>
    %cst = arith.constant dense<0.000000e+00> : vector<8x32xf32>
    %4 = tpu.matmul %2, %3, %cst {dimension_numbers = #tpu.dot_dimension_numbers<[1], [0], [0], [1], [0, 0, 1, 1], [], []>} : vector<8x32xf32>, vector<32x32xf32>, vector<8x32xf32> -> vector<8x32xf32>
    %cst_6 = arith.constant dense<0.000000e+00> : vector<32xf32>
    %5 = vector.multi_reduction <add>, %4, %cst_6 [0] : vector<8x32xf32> to vector<32xf32>
    %6 = vector.shape_cast %5 : vector<32xf32> to vector<1x32xf32>
    %cst_7 = arith.constant 8.000000e+00 : f32
    %7 = vector.broadcast %cst_7 : f32 to vector<1x32xf32>
    %8 = arith.divf %6, %7 : vector<1x32xf32>
    %9 = vector.broadcast %8 : vector<1x32xf32> to vector<8x32xf32>
    %10 = arith.subf %4, %9 : vector<8x32xf32>
    %11 = arith.mulf %10, %10 : vector<8x32xf32>
    %cst_8 = arith.constant dense<0.000000e+00> : vector<32xf32>
    %12 = vector.multi_reduction <add>, %11, %cst_8 [0] : vector<8x32xf32> to vector<32xf32>
    %13 = vector.shape_cast %12 : vector<32xf32> to vector<1x32xf32>
    %cst_9 = arith.constant 8.000000e+00 : f32
    %14 = vector.broadcast %cst_9 : f32 to vector<1x32xf32>
    %15 = arith.divf %13, %14 : vector<1x32xf32>
    %c0_10 = arith.constant 0 : index
    %c0_11 = arith.constant 0 : index
    %16 = vector.load %arg2[%c0_10, %c0_11] : memref<1x32xf32, #tpu.memory_space<vmem>>, vector<1x32xf32>
    %cst_12 = arith.constant 9.99999974E-6 : f32
    %17 = vector.broadcast %cst_12 : f32 to vector<1x32xf32>
    %18 = arith.addf %15, %17 : vector<1x32xf32>
    %19 = math.rsqrt %18 : vector<1x32xf32>
    %20 = arith.mulf %16, %19 : vector<1x32xf32>
    %21 = vector.broadcast %20 : vector<1x32xf32> to vector<8x32xf32>
    %22 = arith.mulf %10, %21 : vector<8x32xf32>
    %c0_13 = arith.constant 0 : index
    %c0_14 = arith.constant 0 : index
    %23 = vector.load %arg3[%c0_13, %c0_14] : memref<1x32xf32, #tpu.memory_space<vmem>>, vector<1x32xf32>
    %24 = vector.broadcast %23 : vector<1x32xf32> to vector<8x32xf32>
    %25 = arith.addf %22, %24 : vector<8x32xf32>
    %cst_15 = arith.constant 0.000000e+00 : f32
    %26 = vector.broadcast %cst_15 : f32 to vector<8x32xf32>
    %27 = arith.maximumf %25, %26 : vector<8x32xf32>
    %c0_16 = arith.constant 0 : index
    %c32 = arith.constant 32 : index
    %28 = vector.load %arg10[%c0_16, %c32] : memref<8x96xf32, #tpu.memory_space<vmem>>, vector<8x32xf32>
    tpu.vector_store %arg10[%c0_16, %c32], %27 {strides = array<i32>} : memref<8x96xf32, #tpu.memory_space<vmem>>, vector<8x32xf32>,
    %c0_17 = arith.constant 0 : index
    %c32_18 = arith.constant 32 : index
    %29 = vector.load %arg10[%c0_17, %c32_18] : memref<8x96xf32, #tpu.memory_space<vmem>>, vector<8x64xf32>
    %c0_19 = arith.constant 0 : index
    %c0_20 = arith.constant 0 : index
    %30 = vector.load %arg4[%c0_19, %c0_20] : memref<64x32xf32, #tpu.memory_space<vmem>>, vector<64x32xf32>
    %cst_21 = arith.constant dense<0.000000e+00> : vector<8x32xf32>
    %31 = tpu.matmul %29, %30, %cst_21 {dimension_numbers = #tpu.dot_dimension_numbers<[1], [0], [0], [1], [0, 0, 1, 1], [], []>} : vector<8x64xf32>, vector<64x32xf32>, vector<8x32xf32> -> vector<8x32xf32>
    %cst_22 = arith.constant dense<0.000000e+00> : vector<32xf32>
    %32 = vector.multi_reduction <add>, %31, %cst_22 [0] : vector<8x32xf32> to vector<32xf32>
    %33 = vector.shape_cast %32 : vector<32xf32> to vector<1x32xf32>
    %cst_23 = arith.constant 8.000000e+00 : f32
    %34 = vector.broadcast %cst_23 : f32 to vector<1x32xf32>
    %35 = arith.divf %33, %34 : vector<1x32xf32>
    %36 = vector.broadcast %35 : vector<1x32xf32> to vector<8x32xf32>
    %37 = arith.subf %31, %36 : vector<8x32xf32>
    %38 = arith.mulf %37, %37 : vector<8x32xf32>
    %cst_24 = arith.constant dense<0.000000e+00> : vector<32xf32>
    %39 = vector.multi_reduction <add>, %38, %cst_24 [0] : vector<8x32xf32> to vector<32xf32>
    %40 = vector.shape_cast %39 : vector<32xf32> to vector<1x32xf32>
    %cst_25 = arith.constant 8.000000e+00 : f32
    %41 = vector.broadcast %cst_25 : f32 to vector<1x32xf32>
    %42 = arith.divf %40, %41 : vector<1x32xf32>
    %c0_26 = arith.constant 0 : index
    %c0_27 = arith.constant 0 : index
    %43 = vector.load %arg5[%c0_26, %c0_27] : memref<1x32xf32, #tpu.memory_space<vmem>>, vector<1x32xf32>
    %cst_28 = arith.constant 9.99999974E-6 : f32
    %44 = vector.broadcast %cst_28 : f32 to vector<1x32xf32>
    %45 = arith.addf %42, %44 : vector<1x32xf32>
    %46 = math.rsqrt %45 : vector<1x32xf32>
    %47 = arith.mulf %43, %46 : vector<1x32xf32>
    %48 = vector.broadcast %47 : vector<1x32xf32> to vector<8x32xf32>
    %49 = arith.mulf %37, %48 : vector<8x32xf32>
    %c0_29 = arith.constant 0 : index
    %c0_30 = arith.constant 0 : index
    %50 = vector.load %arg6[%c0_29, %c0_30] : memref<1x32xf32, #tpu.memory_space<vmem>>, vector<1x32xf32>
    %51 = vector.broadcast %50 : vector<1x32xf32> to vector<8x32xf32>
    %52 = arith.addf %49, %51 : vector<8x32xf32>
    %cst_31 = arith.constant 0.000000e+00 : f32
    %53 = vector.broadcast %cst_31 : f32 to vector<8x32xf32>
    %54 = arith.maximumf %52, %53 : vector<8x32xf32>
    %c0_32 = arith.constant 0 : index
    %c0_33 = arith.constant 0 : index
    %55 = vector.load %arg10[%c0_32, %c0_33] : memref<8x96xf32, #tpu.memory_space<vmem>>, vector<8x32xf32>
    tpu.vector_store %arg10[%c0_32, %c0_33], %54 {strides = array<i32>} : memref<8x96xf32, #tpu.memory_space<vmem>>, vector<8x32xf32>,
    %c0_34 = arith.constant 0 : index
    %c0_35 = arith.constant 0 : index
    %56 = vector.load %arg10[%c0_34, %c0_35] : memref<8x96xf32, #tpu.memory_space<vmem>>, vector<8x96xf32>
    %c0_36 = arith.constant 0 : index
    %c0_37 = arith.constant 0 : index
    %57 = vector.load %arg7[%c0_36, %c0_37] : memref<96x128xf32, #tpu.memory_space<vmem>>, vector<96x128xf32>
    %cst_38 = arith.constant dense<0.000000e+00> : vector<8x128xf32>
    %58 = tpu.matmul %56, %57, %cst_38 {dimension_numbers = #tpu.dot_dimension_numbers<[1], [0], [0], [1], [0, 0, 1, 1], [], []>} : vector<8x96xf32>, vector<96x128xf32>, vector<8x128xf32> -> vector<8x128xf32>
    %c0_39 = arith.constant 0 : index
    %c0_40 = arith.constant 0 : index
    %59 = vector.load %arg8[%c0_39, %c0_40] : memref<1x128xf32, #tpu.memory_space<vmem>>, vector<1x128xf32>
    %60 = vector.broadcast %59 : vector<1x128xf32> to vector<8x128xf32>
    %61 = arith.addf %58, %60 : vector<8x128xf32>
    %c0_41 = arith.constant 0 : index
    %c0_42 = arith.constant 0 : index
    %62 = vector.load %arg9[%c0_41, %c0_42] : memref<8x128xf32, #tpu.memory_space<vmem>>, vector<8x128xf32>
    tpu.vector_store %arg9[%c0_41, %c0_42], %61 {strides = array<i32>} : memref<8x128xf32, #tpu.memory_space<vmem>>, vector<8x128xf32>,
    return
  }
}

</mosaic_0001>

<llo_original>
// kernel: generator_forward.1
$region0: #{generator_forward.1}
  #allocation0 [shape = 'u32[]', space=smem, size = 0x4, offset = 0x4, fixed_abs, tag = 'smem constant byte address 0x4 - core index']
  #allocation1 [shape = 'u32[144,128]{1,0:T(1,128)}', space=vmem, size = 0x12000, scoped, tag = 'internal scratch']
  #allocation2 [shape = 'f32[8,96]{1,0:T(8,128)}', space=vmem, size = 0x1000, scoped, tag = 'scratch operand']
  %s0 = inlined_call_operand.vmem [shape: f32[8,32], index: 0, kind: input, shape index: {}]
  %s1 = inlined_call_operand.vmem [shape: f32[32,32], index: 1, kind: input, shape index: {}]
  %s2 = inlined_call_operand.vmem [shape: f32[1,32], index: 2, kind: input, shape index: {}]
  %s3 = inlined_call_operand.vmem [shape: f32[1,32], index: 3, kind: input, shape index: {}]
  %s4 = inlined_call_operand.vmem [shape: f32[64,32], index: 4, kind: input, shape index: {}]
  %s5 = inlined_call_operand.vmem [shape: f32[1,32], index: 5, kind: input, shape index: {}]
  %s6 = inlined_call_operand.vmem [shape: f32[1,32], index: 6, kind: input, shape index: {}]
  %s7 = inlined_call_operand.vmem [shape: f32[96,128], index: 7, kind: input, shape index: {}]
  %s8 = inlined_call_operand.vmem [shape: f32[1,128], index: 8, kind: input, shape index: {}]
  %s9 = inlined_call_operand.hbm [shape: f32[8,128], index: 9, kind: output, shape index: {}]
  %s10 = sld [smem:[#allocation0]]
  $region46: #{generator_forward.1} parent=0
    _
  %s12 = ssub.s32 1, %s10
  %s13 = scalar_select 0, %s12, %s10
  $region1: #{generator_forward.1} parent=0
    #allocation3 [shape = 'u8[4096]{0}', space=vmem, size = 0x1000, scoped, tag = 'output window, operand 0, single buffered']
    #allocation4 [shape = 's32[1]{0}', space=sflag, size = 0x4, scoped, tag = 'scoped memory for generator_forward.1']
    %14 = vsyncpa [#allocation4], 0
    // Predicated region
    $region2: #{generator_forward.1} parent=1 // pred_check
      _
    $region3: #{generator_forward.1} parent=1 // pred_check_branch
      %16 = sbr.rel (0) target = $region5
    $region4: #{generator_forward.1} parent=1 // pred_region
      _
    $region5: #{generator_forward.1} parent=1 // pred_fallthru
      _
    // Predicated region
    $region6: #{generator_forward.1} parent=1 // pred_check
      _
    $region7: #{generator_forward.1} parent=1 // pred_check_branch
      %18 = sbr.rel (0) target = $region9
    $region8: #{generator_forward.1} parent=1 // pred_region
      _
    $region9: #{generator_forward.1} parent=1 // pred_fallthru
      _
    // Predicated region
    $region10: #{generator_forward.1} parent=1 // pred_check
      _
    $region11: #{generator_forward.1} parent=1 // pred_check_branch
      %20 = sbr.rel (0) target = $region13
    $region12: #{generator_forward.1} parent=1 // pred_region
      _
    $region13: #{generator_forward.1} parent=1 // pred_fallthru
      _
    // Predicated region
    $region14: #{generator_forward.1} parent=1 // pred_check
      _
    $region15: #{generator_forward.1} parent=1 // pred_check_branch
      %22 = sbr.rel (0) target = $region17
    $region16: #{generator_forward.1} parent=1 // pred_region
      _
    $region17: #{generator_forward.1} parent=1 // pred_fallthru
      _
    // Predicated region
    $region18: #{generator_forward.1} parent=1 // pred_check
      _
    $region19: #{generator_forward.1} parent=1 // pred_check_branch
      %24 = sbr.rel (0) target = $region21
    $region20: #{generator_forward.1} parent=1 // pred_region
      _
    $region21: #{generator_forward.1} parent=1 // pred_fallthru
      _
    // Predicated region
    $region22: #{generator_forward.1} parent=1 // pred_check
      _
    $region23: #{generator_forward.1} parent=1 // pred_check_branch
      %26 = sbr.rel (0) target = $region25
    $region24: #{generator_forward.1} parent=1 // pred_region
      _
    $region25: #{generator_forward.1} parent=1 // pred_fallthru
      _
    // Predicated region
    $region26: #{generator_forward.1} parent=1 // pred_check
      _
    $region27: #{generator_forward.1} parent=1 // pred_check_branch
      %28 = sbr.rel (0) target = $region29
    $region28: #{generator_forward.1} parent=1 // pred_region
      _
    $region29: #{generator_forward.1} parent=1 // pred_fallthru
      _
    // Predicated region
    $region30: #{generator_forward.1} parent=1 // pred_check
      _
    $region31: #{generator_forward.1} parent=1 // pred_check_branch
      %30 = sbr.rel (0) target = $region33
    $region32: #{generator_forward.1} parent=1 // pred_region
      _
    $region33: #{generator_forward.1} parent=1 // pred_fallthru
      _
    // Predicated region
    $region34: #{generator_forward.1} parent=1 // pred_check
      _
    $region35: #{generator_forward.1} parent=1 // pred_check_branch
      %32 = sbr.rel (0) target = $region37
    $region36: #{generator_forward.1} parent=1 // pred_region
      _
    $region37: #{generator_forward.1} parent=1 // pred_fallthru
      _
    %v33 = vld [vmem:[%s0] sm:$0xff]
    %35 = vrot.lane.b32.xlu0 %v33, 64
    %v36 = vpop.permute.xlu0 %35
    %vm38 = vcmask 785920
    %39 = vst.msk [vmem:[#allocation2] sm:$0xff] %vm38, %v36
    %v40 = vld [vmem:[#allocation2] sm:$0xff]
    %v41 = vld [vmem:[%s1] sm:$0xff]
    %v42 = vld [vmem:[%s1 + $0x8] sm:$0xff]
    %v43 = vld [vmem:[%s1 + $0x10] sm:$0xff]
    %v44 = vld [vmem:[%s1 + $0x18] sm:$0xff]
    %46 = vrot.lane.b32.xlu0 %v40, 64
    %v47 = vpop.permute.xlu0 %46
    %vm48 = vcmask 261120
    %v49 = vsel %vm48, %v47, 0
    %51 = vmatprep.subr.mxu0 0.0
    %52 = vmatpush1.msra.mxu0 0.0
    %53 = vmatprep.subr.mxu0 0.0
    %54 = vmatpush1.msra.mxu0 0.0
    %55 = vmatprep.subr.mxu0 0.0
    %56 = vmatpush1.msra.mxu0 0.0
    %57 = vmatprep.subr.mxu0 0.0
    %58 = vmatpush1.msra.mxu0 0.0
    %59 = vmatprep.subr.mxu0 0.0
    %60 = vmatpush1.msra.mxu0 0.0
    %61 = vmatprep.subr.mxu0 0.0
    %62 = vmatpush1.msra.mxu0 0.0
    %63 = vmatprep.subr.mxu0 0.0
    %64 = vmatpush1.msra.mxu0 0.0
    %65 = vmatprep.subr.mxu0 0.0
    %66 = vmatpush1.msra.mxu0 0.0
    %67 = vmatprep.subr.mxu0 0.0
    %68 = vmatpush1.msra.mxu0 0.0
    %69 = vmatprep.subr.mxu0 0.0
    %70 = vmatpush1.msra.mxu0 0.0
    %71 = vmatprep.subr.mxu0 0.0
    %72 = vmatpush1.msra.mxu0 0.0
    %73 = vmatprep.subr.mxu0 0.0
    %74 = vmatpush1.msra.mxu0 0.0
    %75 = vmatprep.subr.mxu0 0.0
    %76 = vmatpush1.msra.mxu0 %v44
    %77 = vmatprep.subr.mxu0 0.0
    %78 = vmatpush1.msra.mxu0 %v43
    %79 = vmatprep.subr.mxu0 0.0
    %80 = vmatpush1.msra.mxu0 %v42
    %81 = vmatprep.subr.mxu0 0.0
    %82 = vmatpush1.msra.mxu0 %v41
    %83 = vmatprep.subr.mxu0 0.0
    %84 = vmatpush2.msra.mxu0 0.0
    %85 = vmatprep.subr.mxu0 0.0
    %86 = vmatpush2.msra.mxu0 0.0
    %87 = vmatprep.subr.mxu0 0.0
    %88 = vmatpush2.msra.mxu0 0.0
    %89 = vmatprep.subr.mxu0 0.0
    %90 = vmatpush2.msra.mxu0 0.0
    %91 = vmatprep.subr.mxu0 0.0
    %92 = vmatpush2.msra.mxu0 0.0
    %93 = vmatprep.subr.mxu0 0.0
    %94 = vmatpush2.msra.mxu0 0.0
    %95 = vmatprep.subr.mxu0 0.0
    %96 = vmatpush2.msra.mxu0 0.0
    %97 = vmatprep.subr.mxu0 0.0
    %98 = vmatpush2.msra.mxu0 0.0
    %99 = vmatprep.subr.mxu0 0.0
    %100 = vmatpush2.msra.mxu0 0.0
    %101 = vmatprep.subr.mxu0 0.0
    %102 = vmatpush2.msra.mxu0 0.0
    %103 = vmatprep.subr.mxu0 0.0
    %104 = vmatpush2.msra.mxu0 0.0
    %105 = vmatprep.subr.mxu0 0.0
    %106 = vmatpush2.msra.mxu0 0.0
    %107 = vmatprep.subr.mxu0 0.0
    %108 = vmatpush2.msra.mxu0 0.0
    %109 = vmatprep.subr.mxu0 0.0
    %110 = vmatpush2.msra.mxu0 0.0
    %111 = vmatprep.subr.mxu0 0.0
    %112 = vmatpush2.msra.mxu0 0.0
    %113 = vmatprep.subr.mxu0 0.0
    %114 = vmatpush2.msra.mxu0 0.0
    %115 = vmatprep.mubr.f32.mxu0 0.0
    %116 = vmatmul.mubr.f32.gmra.mxu0 %v49
    %v117 = vpop.f32.mrf.mxu0
    %v118 = vadd.f32 0.0, %v117
    %v119 = vpop.f32.mrf.mxu0
    %120 = vdwg.mxu0
    %v121 = vsel %vm48, %v118, 0.0
    %v122 = vrot.slane %v121, 4
    %v123 = vadd.f32 %v121, %v122
    %v124 = vrot.slane %v123, 2
    %v125 = vadd.f32 %v123, %v124
    %v126 = vrot.slane %v125, 1
    %v127 = vadd.f32 %v125, %v126
    %v128 = vrcp.pop 8.0
    %v129 = vmul.f32 %v127, %v128
    %v130 = vsub.f32 %v118, %v129
    %v131 = vmul.f32 %v130, %v130
    %v132 = vsel %vm48, %v131, 0.0
    %v133 = vrot.slane %v132, 4
    %v134 = vadd.f32 %v132, %v133
    %v135 = vrot.slane %v134, 2
    %v136 = vadd.f32 %v134, %v135
    %v137 = vrot.slane %v136, 1
    %v138 = vadd.f32 %v136, %v137
    %v139 = vmul.f32 %v138, %v128
    %v140 = vld [vmem:[%s2] sm:$0x1]
    %v141 = vadd.f32 %v139, 1e-05
    %v142 = vrsqrt.pop %v141
    %v143 = vmul.f32 %v140, %v142
    %v145 = vlaneseq
    %v146 = vshrl.u32 %v145, 7
    %v147 = vsub.s32 0, %v146
    %v148 = vrot.slane %v143, %v147
    %v150 = vmul.f32 %v130, %v148
    %v151 = vld [vmem:[%s3] sm:$0x1]
    %v153 = vlaneseq
    %v154 = vshrl.u32 %v153, 7
    %v155 = vsub.s32 0, %v154
    %v156 = vrot.slane %v151, %v155
    %v158 = vadd.f32 %v150, %v156
    %v159 = vmax.f32 %v158, 0.0
    %161 = vrot.lane.b32.xlu0 %v159, 32
    %v162 = vpop.permute.xlu0 %161
    %vm164 = vcmask 523520
    %165 = vst.msk [vmem:[#allocation2] sm:$0xff] %vm164, %v162
    %v166 = vld [vmem:[#allocation2] sm:$0xff]
    %v167 = vld [vmem:[%s4] sm:$0xff]
    %v168 = vld [vmem:[%s4 + $0x8] sm:$0xff]
    %v169 = vld [vmem:[%s4 + $0x10] sm:$0xff]
    %v170 = vld [vmem:[%s4 + $0x18] sm:$0xff]
    %v171 = vld [vmem:[%s4 + $0x20] sm:$0xff]
    %v172 = vld [vmem:[%s4 + $0x28] sm:$0xff]
    %v173 = vld [vmem:[%s4 + $0x30] sm:$0xff]
    %v174 = vld [vmem:[%s4 + $0x38] sm:$0xff]
    %176 = vrot.lane.b32.xlu0 %v166, 96
    %v177 = vpop.permute.xlu0 %176
    %vm178 = vcmask 523264
    %v179 = vsel %vm178, %v177, 0
    %181 = vmatprep.subr.mxu0 0.0
    %182 = vmatpush1.msra.mxu0 0.0
    %183 = vmatprep.subr.mxu0 0.0
    %184 = vmatpush1.msra.mxu0 0.0
    %185 = vmatprep.subr.mxu0 0.0
    %186 = vmatpush1.msra.mxu0 0.0
    %187 = vmatprep.subr.mxu0 0.0
    %188 = vmatpush1.msra.mxu0 0.0
    %189 = vmatprep.subr.mxu0 0.0
    %190 = vmatpush1.msra.mxu0 0.0
    %191 = vmatprep.subr.mxu0 0.0
    %192 = vmatpush1.msra.mxu0 0.0
    %193 = vmatprep.subr.mxu0 0.0
    %194 = vmatpush1.msra.mxu0 0.0
    %195 = vmatprep.subr.mxu0 0.0
    %196 = vmatpush1.msra.mxu0 0.0
    %197 = vmatprep.subr.mxu0 0.0
    %198 = vmatpush1.msra.mxu0 %v174
    %199 = vmatprep.subr.mxu0 0.0
    %200 = vmatpush1.msra.mxu0 %v173
    %201 = vmatprep.subr.mxu0 0.0
    %202 = vmatpush1.msra.mxu0 %v172
    %203 = vmatprep.subr.mxu0 0.0
    %204 = vmatpush1.msra.mxu0 %v171
    %205 = vmatprep.subr.mxu0 0.0
    %206 = vmatpush1.msra.mxu0 %v170
    %207 = vmatprep.subr.mxu0 0.0
    %208 = vmatpush1.msra.mxu0 %v169
    %209 = vmatprep.subr.mxu0 0.0
    %210 = vmatpush1.msra.mxu0 %v168
    %211 = vmatprep.subr.mxu0 0.0
    %212 = vmatpush1.msra.mxu0 %v167
    %213 = vmatprep.subr.mxu0 0.0
    %214 = vmatpush2.msra.mxu0 0.0
    %215 = vmatprep.subr.mxu0 0.0
    %216 = vmatpush2.msra.mxu0 0.0
    %217 = vmatprep.subr.mxu0 0.0
    %218 = vmatpush2.msra.mxu0 0.0
    %219 = vmatprep.subr.mxu0 0.0
    %220 = vmatpush2.msra.mxu0 0.0
    %221 = vmatprep.subr.mxu0 0.0
    %222 = vmatpush2.msra.mxu0 0.0
    %223 = vmatprep.subr.mxu0 0.0
    %224 = vmatpush2.msra.mxu0 0.0
    %225 = vmatprep.subr.mxu0 0.0
    %226 = vmatpush2.msra.mxu0 0.0
    %227 = vmatprep.subr.mxu0 0.0
    %228 = vmatpush2.msra.mxu0 0.0
    %229 = vmatprep.subr.mxu0 0.0
    %230 = vmatpush2.msra.mxu0 0.0
    %231 = vmatprep.subr.mxu0 0.0
    %232 = vmatpush2.msra.mxu0 0.0
    %233 = vmatprep.subr.mxu0 0.0
    %234 = vmatpush2.msra.mxu0 0.0
    %235 = vmatprep.subr.mxu0 0.0
    %236 = vmatpush2.msra.mxu0 0.0
    %237 = vmatprep.subr.mxu0 0.0
    %238 = vmatpush2.msra.mxu0 0.0
    %239 = vmatprep.subr.mxu0 0.0
    %240 = vmatpush2.msra.mxu0 0.0
    %241 = vmatprep.subr.mxu0 0.0
    %242 = vmatpush2.msra.mxu0 0.0
    %243 = vmatprep.subr.mxu0 0.0
    %244 = vmatpush2.msra.mxu0 0.0
    %245 = vmatprep.mubr.f32.mxu0 0.0
    %246 = vmatmul.mubr.f32.gmra.mxu0 %v179
    %v247 = vpop.f32.mrf.mxu0
    %v248 = vadd.f32 0.0, %v247
    %v249 = vpop.f32.mrf.mxu0
    %250 = vdwg.mxu0
    %v251 = vsel %vm48, %v248, 0.0
    %v252 = vrot.slane %v251, 4
    %v253 = vadd.f32 %v251, %v252
    %v254 = vrot.slane %v253, 2
    %v255 = vadd.f32 %v253, %v254
    %v256 = vrot.slane %v255, 1
    %v257 = vadd.f32 %v255, %v256
    %v258 = vmul.f32 %v257, %v128
    %v259 = vsub.f32 %v248, %v258
    %v260 = vmul.f32 %v259, %v259
    %v261 = vsel %vm48, %v260, 0.0
    %v262 = vrot.slane %v261, 4
    %v263 = vadd.f32 %v261, %v262
    %v264 = vrot.slane %v263, 2
    %v265 = vadd.f32 %v263, %v264
    %v266 = vrot.slane %v265, 1
    %v267 = vadd.f32 %v265, %v266
    %v268 = vmul.f32 %v267, %v128
    %v269 = vld [vmem:[%s5] sm:$0x1]
    %v270 = vadd.f32 %v268, 1e-05
    %v271 = vrsqrt.pop %v270
    %v272 = vmul.f32 %v269, %v271
    %v274 = vlaneseq
    %v275 = vshrl.u32 %v274, 7
    %v276 = vsub.s32 0, %v275
    %v277 = vrot.slane %v272, %v276
    %v279 = vmul.f32 %v259, %v277
    %v280 = vld [vmem:[%s6] sm:$0x1]
    %v282 = vlaneseq
    %v283 = vshrl.u32 %v282, 7
    %v284 = vsub.s32 0, %v283
    %v285 = vrot.slane %v280, %v284
    %v287 = vadd.f32 %v279, %v285
    %v288 = vmax.f32 %v287, 0.0
    %289 = vst.msk [vmem:[#allocation2] sm:$0xff] %vm48, %v288
    %v290 = vld [vmem:[#allocation2] sm:$0xff]
    %v291 = vld [vmem:[%s7] sm:$0xff]
    %v292 = vld [vmem:[%s7 + $0x8] sm:$0xff]
    %v293 = vld [vmem:[%s7 + $0x10] sm:$0xff]
    %v294 = vld [vmem:[%s7 + $0x18] sm:$0xff]
    %v295 = vld [vmem:[%s7 + $0x20] sm:$0xff]
    %v296 = vld [vmem:[%s7 + $0x28] sm:$0xff]
    %v297 = vld [vmem:[%s7 + $0x30] sm:$0xff]
    %v298 = vld [vmem:[%s7 + $0x38] sm:$0xff]
    %v299 = vld [vmem:[%s7 + $0x40] sm:$0xff]
    %v300 = vld [vmem:[%s7 + $0x48] sm:$0xff]
    %v301 = vld [vmem:[%s7 + $0x50] sm:$0xff]
    %v302 = vld [vmem:[%s7 + $0x58] sm:$0xff]
    %v303 = vld [vmem:[%s8] sm:$0x1]
    %v305 = vlaneseq
    %v306 = vshrl.u32 %v305, 7
    %v307 = vsub.s32 0, %v306
    %v308 = vrot.slane %v303, %v307
    %vm310 = vcmask 785408
    %v312 = vsel %vm310, %v290, 0
    %314 = vmatprep.subr.mxu0 0.0
    %315 = vmatpush1.msra.mxu0 0.0
    %316 = vmatprep.subr.mxu0 0.0
    %317 = vmatpush1.msra.mxu0 0.0
    %318 = vmatprep.subr.mxu0 0.0
    %319 = vmatpush1.msra.mxu0 0.0
    %320 = vmatprep.subr.mxu0 0.0
    %321 = vmatpush1.msra.mxu0 0.0
    %322 = vmatprep.subr.mxu0 0.0
    %323 = vmatpush1.msra.mxu0 %v302
    %324 = vmatprep.subr.mxu0 0.0
    %325 = vmatpush1.msra.mxu0 %v301
    %326 = vmatprep.subr.mxu0 0.0
    %327 = vmatpush1.msra.mxu0 %v300
    %328 = vmatprep.subr.mxu0 0.0
    %329 = vmatpush1.msra.mxu0 %v299
    %330 = vmatprep.subr.mxu0 0.0
    %331 = vmatpush1.msra.mxu0 %v298
    %332 = vmatprep.subr.mxu0 0.0
    %333 = vmatpush1.msra.mxu0 %v297
    %334 = vmatprep.subr.mxu0 0.0
    %335 = vmatpush1.msra.mxu0 %v296
    %336 = vmatprep.subr.mxu0 0.0
    %337 = vmatpush1.msra.mxu0 %v295
    %338 = vmatprep.subr.mxu0 0.0
    %339 = vmatpush1.msra.mxu0 %v294
    %340 = vmatprep.subr.mxu0 0.0
    %341 = vmatpush1.msra.mxu0 %v293
    %342 = vmatprep.subr.mxu0 0.0
    %343 = vmatpush1.msra.mxu0 %v292
    %344 = vmatprep.subr.mxu0 0.0
    %345 = vmatpush1.msra.mxu0 %v291
    %346 = vmatprep.subr.mxu0 0.0
    %347 = vmatpush2.msra.mxu0 0.0
    %348 = vmatprep.subr.mxu0 0.0
    %349 = vmatpush2.msra.mxu0 0.0
    %350 = vmatprep.subr.mxu0 0.0
    %351 = vmatpush2.msra.mxu0 0.0
    %352 = vmatprep.subr.mxu0 0.0
    %353 = vmatpush2.msra.mxu0 0.0
    %354 = vmatprep.subr.mxu0 0.0
    %355 = vmatpush2.msra.mxu0 0.0
    %356 = vmatprep.subr.mxu0 0.0
    %357 = vmatpush2.msra.mxu0 0.0
    %358 = vmatprep.subr.mxu0 0.0
    %359 = vmatpush2.msra.mxu0 0.0
    %360 = vmatprep.subr.mxu0 0.0
    %361 = vmatpush2.msra.mxu0 0.0
    %362 = vmatprep.subr.mxu0 0.0
    %363 = vmatpush2.msra.mxu0 0.0
    %364 = vmatprep.subr.mxu0 0.0
    %365 = vmatpush2.msra.mxu0 0.0
    %366 = vmatprep.subr.mxu0 0.0
    %367 = vmatpush2.msra.mxu0 0.0
    %368 = vmatprep.subr.mxu0 0.0
    %369 = vmatpush2.msra.mxu0 0.0
    %370 = vmatprep.subr.mxu0 0.0
    %371 = vmatpush2.msra.mxu0 0.0
    %372 = vmatprep.subr.mxu0 0.0
    %373 = vmatpush2.msra.mxu0 0.0
    %374 = vmatprep.subr.mxu0 0.0
    %375 = vmatpush2.msra.mxu0 0.0
    %376 = vmatprep.subr.mxu0 0.0
    %377 = vmatpush2.msra.mxu0 0.0
    %378 = vmatprep.mubr.f32.mxu0 0.0
    %379 = vmatmul.mubr.f32.gmra.mxu0 %v312
    %v380 = vpop.f32.mrf.mxu0
    %v381 = vadd.f32 %v308, %v380
    %v382 = vpop.f32.mrf.mxu0
    %383 = vdwg.mxu0
    %384 = vst [vmem:[#allocation3] sm:$0xff] %v381
    // Predicated region
    $region38: #{generator_forward.1} parent=1 // pred_check
      _
    $region39: #{generator_forward.1} parent=1 // pred_check_branch
      %386 = sbr.rel (0) target = $region41
    $region40: #{generator_forward.1} parent=1 // pred_region
      %s388 = ssub.s32 128, 128
      %389 = vsyncadd [#allocation4], %s388
      %s391 = sshll.u32 [#allocation3], 4
      %s392 = int_to_ptr.vmem [resolvable:$true] %s391
      %394 = dma.vmem_to_hbm [thread:$0]  %s392, 128, %s9, [#allocation4]
    $region41: #{generator_forward.1} parent=1 // pred_fallthru
      _
    // Predicated region
    $region42: #{generator_forward.1} parent=1 // pred_check
      _
    $region43: #{generator_forward.1} parent=1 // pred_check_branch
      %396 = sbr.rel (0) target = $region45
    $region44: #{generator_forward.1} parent=1 // pred_region
      %397 = dma.done [#allocation4], 128
    $region45: #{generator_forward.1} parent=1 // pred_fallthru
      _
    %398 = vsyncpa [#allocation4], 1

</llo_original>
